<compile_context>
chip_gen: v7x
topology: tpu7x:2x2x1
jax: 0.10.0
libtpu: 0.0.40
codegen_flags: <defaults>
</compile_context>

<pallas_src>
import functools

import jax
import jax.numpy as jnp
from jax.experimental import pallas as pl
from jax.experimental.pallas import tpu as pltpu


# ----------------------------- Pallas kernels ------------------------------ #

def _conv_stats_kernel(w_ref, pT_ref, o_ref, s1_ref, s2_ref):
    # w_ref:  (Cout, K)  bf16   flattened conv weight
    # pT_ref: (K, tm)    bf16   im2col patches (transposed, lane axis = M)
    # o_ref:  (Cout, tm) f32    conv output tile (lane-dense)
    # s1/s2:  (1, Cout, 1) f32  per-tile partial sum / sum-of-squares
    y = jnp.dot(w_ref[...], pT_ref[...], preferred_element_type=jnp.float32)
    o_ref[...] = y
    s1_ref[...] = jnp.sum(y, axis=1, keepdims=True)[None]       # (1, Cout, 1)
    s2_ref[...] = jnp.sum(y * y, axis=1, keepdims=True)[None]   # (1, Cout, 1)


def _bn_lrelu_kernel(s1_ref, s2_ref, y_ref, g_ref, b_ref, o_ref, *,
                     inv_m, eps, neg_slope):
    # s1/s2: (T, Cout, 1) partial stats from every M-tile; y: (Cout, tm).
    mean = jnp.sum(s1_ref[...], axis=0) * inv_m                  # (Cout, 1)
    var = jnp.sum(s2_ref[...], axis=0) * inv_m - mean * mean     # biased var
    inv_std = jax.lax.rsqrt(var + eps)
    scale = g_ref[...] * inv_std                                 # (Cout, 1)
    shift = b_ref[...] - mean * scale
    z = y_ref[...] * scale + shift                               # (Cout, tm)
    o_ref[...] = jnp.where(z >= 0.0, z, neg_slope * z)           # LeakyReLU


# ------------------------------- Wrapper ----------------------------------- #

def down_sample_block(x, weight, bias, gamma, beta, *, stride=2, padding=1,
                      eps=1e-5, neg_slope=0.2):
    """x: (N, Cin, H, W) NCHW f32. weight: (Cout, Cin, kh, kw). Returns NCHW.

    `bias` is accepted for API parity with nn.Conv2d but intentionally unused:
    training-mode BatchNorm subtracts the per-channel batch mean, which
    cancels a constant per-channel bias exactly.
    """
    del bias
    N, Cin, H, W = x.shape
    Cout, _, kh, kw = weight.shape
    Ho = (H + 2 * padding - kh) // stride + 1
    Wo = (W + 2 * padding - kw) // stride + 1
    M = N * Ho * Wo
    K = Cin * kh * kw

    # ---- glue: im2col straight into the transposed, lane-friendly (K, M)
    # orientation (K ordered (Cin, kh, kw); M ordered (N, Ho, Wo)).
    # TODO(synk): assemble the patches inside the kernel from the padded input
    # (strided VMEM slices / DMAs) to avoid materializing this 4x
    # read-amplified (K, M) array in HBM.
    xp = jnp.pad(x, ((0, 0), (0, 0), (padding, padding), (padding, padding)))
    taps = []
    for i in range(kh):
        for j in range(kw):
            taps.append(xp[:, :, i:i + stride * Ho:stride, j:j + stride * Wo:stride])
    pT = (jnp.stack(taps, axis=2)            # (N, Cin, kh*kw, Ho, Wo)
          .transpose(1, 2, 0, 3, 4)          # (Cin, kh*kw, N, Ho, Wo)
          .reshape(K, M))

    # ---- tiling: lane axis = M, tiles of tm (multiple of 128), cdiv grid.
    tm = min(512, pl.cdiv(M, 128) * 128)
    T = pl.cdiv(M, tm)
    M_pad = T * tm
    if M_pad != M:
        # Zero columns are exact: with no conv bias they produce exactly zero
        # conv outputs, contributing nothing to sum / sumsq (we divide by the
        # real M), and the padded region is sliced off at the end.
        pT = jnp.pad(pT, ((0, 0), (0, M_pad - M)))

    pT = pT.astype(jnp.bfloat16)                           # bf16 MXU inputs
    w_mat = weight.reshape(Cout, K).astype(jnp.bfloat16)   # (Cout, K)

    # ---- pass 1: conv as (Cout,K)@(K,tm) matmul + per-tile partial BN stats.
    conv_out, sums, sumsqs = pl.pallas_call(
        _conv_stats_kernel,
        out_shape=(
            jax.ShapeDtypeStruct((Cout, M_pad), jnp.float32),
            jax.ShapeDtypeStruct((T, Cout, 1), jnp.float32),
            jax.ShapeDtypeStruct((T, Cout, 1), jnp.float32),
        ),
        grid_spec=pltpu.PrefetchScalarGridSpec(
            num_scalar_prefetch=0,
            grid=(T,),
            in_specs=[
                pl.BlockSpec((Cout, K), lambda i: (0, 0)),
                pl.BlockSpec((K, tm), lambda i: (0, i)),
            ],
            out_specs=[
                pl.BlockSpec((Cout, tm), lambda i: (0, i)),
                pl.BlockSpec((1, Cout, 1), lambda i: (i, 0, 0)),
                pl.BlockSpec((1, Cout, 1), lambda i: (i, 0, 0)),
            ],
        ),
        compiler_params=pltpu.CompilerParams(
            dimension_semantics=("parallel",)),
    )(w_mat, pT)

    # ---- pass 2: combine partial stats, normalize + affine + LeakyReLU.
    g_col = gamma.reshape(Cout, 1).astype(jnp.float32)
    b_col = beta.reshape(Cout, 1).astype(jnp.float32)
    bn_kernel = functools.partial(
        _bn_lrelu_kernel, inv_m=1.0 / M, eps=eps, neg_slope=neg_slope)

    y = pl.pallas_call(
        bn_kernel,
        out_shape=jax.ShapeDtypeStruct((Cout, M_pad), jnp.float32),
        grid_spec=pltpu.PrefetchScalarGridSpec(
            num_scalar_prefetch=0,
            grid=(T,),
            in_specs=[
                pl.BlockSpec((T, Cout, 1), lambda i: (0, 0, 0)),
                pl.BlockSpec((T, Cout, 1), lambda i: (0, 0, 0)),
                pl.BlockSpec((Cout, tm), lambda i: (0, i)),
                pl.BlockSpec((Cout, 1), lambda i: (0, 0)),
                pl.BlockSpec((Cout, 1), lambda i: (0, 0)),
            ],
            out_specs=pl.BlockSpec((Cout, tm), lambda i: (0, i)),
        ),
        compiler_params=pltpu.CompilerParams(
            dimension_semantics=("parallel",)),
    )(sums, sumsqs, conv_out, g_col, b_col)

    # ---- glue: back to NCHW. (A chained Pallas block could consume the
    # lane-dense (Cout, M) layout directly and skip this transpose.)
    y = y[:, :M]
    return y.reshape(Cout, N, Ho, Wo).transpose(1, 0, 2, 3)


# ----------------------------- Reference (JAX) ------------------------------ #

def _reference(x, weight, bias, gamma, beta, *, stride=2, padding=1):
    y = jax.lax.conv_general_dilated(
        x.astype(jnp.float32), weight.astype(jnp.float32),
        window_strides=(stride, stride),
        padding=[(padding, padding), (padding, padding)],
        dimension_numbers=("NCHW", "OIHW", "NCHW"))
    y = y + bias.reshape(1, -1, 1, 1)
    mean = jnp.mean(y, axis=(0, 2, 3), keepdims=True)
    var = jnp.mean((y - mean) ** 2, axis=(0, 2, 3), keepdims=True)
    yhat = (y - mean) * jax.lax.rsqrt(var + 1e-5)
    z = yhat * gamma.reshape(1, -1, 1, 1) + beta.reshape(1, -1, 1, 1)
    return jnp.where(z >= 0.0, z, 0.2 * z)


# --------------------------------- Main ------------------------------------ #

if __name__ == "__main__":
    key = jax.random.PRNGKey(0)
    k1, k2, k3 = jax.random.split(key, 3)

    N, Cin, H, W = 2, 4, 16, 16
    Cout, kh, kw_sz = 8, 4, 4

    x = jax.random.normal(k1, (N, Cin, H, W), dtype=jnp.float32)
    weight = 0.1 * jax.random.normal(k2, (Cout, Cin, kh, kw_sz), dtype=jnp.float32)
    bias = 0.05 * jax.random.normal(k3, (Cout,), dtype=jnp.float32)
    gamma = jnp.ones((Cout,), jnp.float32)   # BatchNorm2d default affine init
    beta = jnp.zeros((Cout,), jnp.float32)

    out = down_sample_block(x, weight, bias, gamma, beta, stride=2, padding=1)
    out = jax.block_until_ready(out)

    ref = _reference(x, weight, bias, gamma, beta, stride=2, padding=1)
    assert out.shape == (N, Cout, 8, 8), out.shape
    # bf16 MXU inputs (f32 accumulation) vs a pure-f32 reference: expected
    # absolute error is a few 1e-3 after the batch-norm rescale.
    max_err = float(jnp.max(jnp.abs(out - ref)))
    assert max_err < 5e-2, max_err

    print("KERNEL_OK")
</pallas_src>

<mosaic_0001>
module attributes {stable_mosaic.version = 11 : i64} {
  func.func @_conv_stats_kernel(%arg0: i32, %arg1: memref<8x64xbf16, #tpu.memory_space<vmem>>, %arg2: memref<64x128xbf16, #tpu.memory_space<vmem>>, %arg3: memref<8x128xf32, #tpu.memory_space<vmem>>, %arg4: memref<1x8x1xf32, #tpu.memory_space<vmem>>, %arg5: memref<1x8x1xf32, #tpu.memory_space<vmem>>) attributes {dimension_semantics = [#tpu.dimension_semantics<parallel>], iteration_bounds = array<i64: 1>, scalar_prefetch = 0 : i64, scratch_operands = 0 : i64, tpu.core_type = #tpu.core_type<tc>, window_params = [{pipeline_mode = #tpu.pipeline_mode<synchronous>, transform_indices = @transform_0, window_bounds = array<i64: 8, 64>}, {transform_indices = @transform_1, window_bounds = array<i64: 64, 128>}, {transform_indices = @transform_2, window_bounds = array<i64: 8, 128>}, {transform_indices = @transform_3, window_bounds = array<i64: 1, 8, 1>}, {transform_indices = @transform_4, window_bounds = array<i64: 1, 8, 1>}]} {
    %c0 = arith.constant 0 : index
    %c0_0 = arith.constant 0 : index
    %0 = vector.load %arg1[%c0, %c0_0] : memref<8x64xbf16, #tpu.memory_space<vmem>>, vector<8x64xbf16>
    %c0_1 = arith.constant 0 : index
    %c0_2 = arith.constant 0 : index
    %1 = vector.load %arg2[%c0_1, %c0_2] : memref<64x128xbf16, #tpu.memory_space<vmem>>, vector<64x128xbf16>
    %cst = arith.constant dense<0.000000e+00> : vector<8x128xf32>
    %2 = tpu.matmul %0, %1, %cst {dimension_numbers = #tpu.dot_dimension_numbers<[1], [0], [0], [1], [0, 0, 1, 1], [], []>} : vector<8x64xbf16>, vector<64x128xbf16>, vector<8x128xf32> -> vector<8x128xf32>
    %c0_3 = arith.constant 0 : index
    %c0_4 = arith.constant 0 : index
    %3 = vector.load %arg3[%c0_3, %c0_4] : memref<8x128xf32, #tpu.memory_space<vmem>>, vector<8x128xf32>
    tpu.vector_store %arg3[%c0_3, %c0_4], %2 {strides = array<i32>} : memref<8x128xf32, #tpu.memory_space<vmem>>, vector<8x128xf32>,
    %cst_5 = arith.constant dense<0.000000e+00> : vector<8xf32>
    %4 = vector.multi_reduction <add>, %2, %cst_5 [1] : vector<8x128xf32> to vector<8xf32>
    %5 = vector.shape_cast %4 : vector<8xf32> to vector<8x1xf32>
    %6 = vector.shape_cast %5 : vector<8x1xf32> to vector<1x8x1xf32>
    %c0_6 = arith.constant 0 : index
    %c0_7 = arith.constant 0 : index
    %c0_8 = arith.constant 0 : index
    %7 = vector.load %arg4[%c0_6, %c0_7, %c0_8] : memref<1x8x1xf32, #tpu.memory_space<vmem>>, vector<1x8x1xf32>
    tpu.vector_store %arg4[%c0_6, %c0_7, %c0_8], %6 {strides = array<i32>} : memref<1x8x1xf32, #tpu.memory_space<vmem>>, vector<1x8x1xf32>,
    %8 = arith.mulf %2, %2 : vector<8x128xf32>
    %cst_9 = arith.constant dense<0.000000e+00> : vector<8xf32>
    %9 = vector.multi_reduction <add>, %8, %cst_9 [1] : vector<8x128xf32> to vector<8xf32>
    %10 = vector.shape_cast %9 : vector<8xf32> to vector<8x1xf32>
    %11 = vector.shape_cast %10 : vector<8x1xf32> to vector<1x8x1xf32>
    %c0_10 = arith.constant 0 : index
    %c0_11 = arith.constant 0 : index
    %c0_12 = arith.constant 0 : index
    %12 = vector.load %arg5[%c0_10, %c0_11, %c0_12] : memref<1x8x1xf32, #tpu.memory_space<vmem>>, vector<1x8x1xf32>
    tpu.vector_store %arg5[%c0_10, %c0_11, %c0_12], %11 {strides = array<i32>} : memref<1x8x1xf32, #tpu.memory_space<vmem>>, vector<1x8x1xf32>,
    return
  }
  func.func @transform_0(%arg0: i32) -> (i32, i32) {
    %c0_i32 = arith.constant 0 : i32
    %c0_i32_0 = arith.constant 0 : i32
    %c0_i32_1 = arith.constant 0 : i32
    return %c0_i32, %c0_i32_0 : i32, i32
  }
  func.func @transform_1(%arg0: i32) -> (i32, i32) {
    %c0_i32 = arith.constant 0 : i32
    %c0_i32_0 = arith.constant 0 : i32
    return %c0_i32, %arg0 : i32, i32
  }
  func.func @transform_2(%arg0: i32) -> (i32, i32) {
    %c0_i32 = arith.constant 0 : i32
    %c0_i32_0 = arith.constant 0 : i32
    return %c0_i32, %arg0 : i32, i32
  }
  func.func @transform_3(%arg0: i32) -> (i32, i32, i32) {
    %c0_i32 = arith.constant 0 : i32
    %c0_i32_0 = arith.constant 0 : i32
    %c0_i32_1 = arith.constant 0 : i32
    return %arg0, %c0_i32, %c0_i32_0 : i32, i32, i32
  }
  func.func @transform_4(%arg0: i32) -> (i32, i32, i32) {
    %c0_i32 = arith.constant 0 : i32
    %c0_i32_0 = arith.constant 0 : i32
    %c0_i32_1 = arith.constant 0 : i32
    return %arg0, %c0_i32, %c0_i32_0 : i32, i32, i32
  }
}

</mosaic_0001>

<llo_original>
// kernel: tpu_custom_call.1
$region0: #{tpu_custom_call.1}
  #allocation0 [shape = 'u32[]', space=smem, size = 0x4, offset = 0x4, fixed_abs, tag = 'smem constant byte address 0x4 - core index']
  #allocation1 [shape = 'u32[144,128]{1,0:T(1,128)}', space=vmem, size = 0x12000, scoped, tag = 'internal scratch']
  %s0 = inlined_call_operand.hbm [shape: bf16[8,64], index: 0, kind: input, shape index: {}]
  %s1 = inlined_call_operand.hbm [shape: bf16[64,128], index: 1, kind: input, shape index: {}]
  %s2 = inlined_call_operand.hbm [shape: f32[8,128], index: 2, kind: output, shape index: {0}]
  %s3 = inlined_call_operand.vmem [shape: f32[1,8,1], index: 3, kind: output, shape index: {1}]
  %s4 = inlined_call_operand.vmem [shape: f32[1,8,1], index: 4, kind: output, shape index: {2}]
  %5 = xla_tuple %s2, %s3, %s4
  %s6 = sld [smem:[#allocation0]]
  $region42: #{tpu_custom_call.1} parent=0
    _
  %s8 = ssub.s32 1, %s6
  %s9 = scalar_select 0, %s8, %s6
  $region1: #{tpu_custom_call.1} parent=0
    #allocation2 [shape = 'u8[2048]{0}', space=vmem, size = 0x800, scoped, tag = 'input window, operand 0, single buffered']
    #allocation3 [shape = 's32[1]{0}', space=sflag, size = 0x4, scoped, tag = 'scoped memory for tpu_custom_call.1']
    #allocation4 [shape = 's32[1]{0}', space=sflag, size = 0x4, scoped, tag = 'scoped memory for tpu_custom_call.1']
    #allocation5 [shape = 'u8[16384]{0}', space=vmem, size = 0x4000, scoped, tag = 'input window, operand 1, single buffered']
    #allocation6 [shape = 's32[1]{0}', space=sflag, size = 0x4, scoped, tag = 'scoped memory for tpu_custom_call.1']
    #allocation7 [shape = 'u8[4096]{0}', space=vmem, size = 0x1000, scoped, tag = 'output window, operand 0, single buffered']
    %10 = vsyncpa [#allocation3], 0
    %11 = vsyncpa [#allocation6], 0
    %12 = vsyncpa [#allocation4], 0
    // Predicated region
    $region2: #{tpu_custom_call.1} parent=1 // pred_check
      _
    $region3: #{tpu_custom_call.1} parent=1 // pred_check_branch
      %14 = sbr.rel (0) target = $region5
    $region4: #{tpu_custom_call.1} parent=1 // pred_region
      %s16 = ssub.s32 64, 64
      %17 = vsyncadd [#allocation3], %s16
      %s19 = sshll.u32 [#allocation2], 4
      %s20 = int_to_ptr.vmem [resolvable:$true] %s19
      %22 = dma.hbm_to_vmem [thread:$0]  %s0, 64, %s20, [#allocation3]
    $region5: #{tpu_custom_call.1} parent=1 // pred_fallthru
      _
    // Predicated region
    $region6: #{tpu_custom_call.1} parent=1 // pred_check
      _
    $region7: #{tpu_custom_call.1} parent=1 // pred_check_branch
      %24 = sbr.rel (0) target = $region9
    $region8: #{tpu_custom_call.1} parent=1 // pred_region
      %s26 = ssub.s32 512, 512
      %27 = vsyncadd [#allocation6], %s26
      %s28 = sshll.u32 [#allocation5], 4
      %s29 = int_to_ptr.vmem [resolvable:$true] %s28
      %34 = dma.hbm_to_vmem [thread:$0]  %s1, 512, %s29, [#allocation6], 64, 64, 4
    $region9: #{tpu_custom_call.1} parent=1 // pred_fallthru
      _
    // Predicated region
    $region10: #{tpu_custom_call.1} parent=1 // pred_check
      _
    $region11: #{tpu_custom_call.1} parent=1 // pred_check_branch
      %36 = sbr.rel (0) target = $region13
    $region12: #{tpu_custom_call.1} parent=1 // pred_region
      %37 = dma.done [#allocation3], 64
    $region13: #{tpu_custom_call.1} parent=1 // pred_fallthru
      _
    // Predicated region
    $region14: #{tpu_custom_call.1} parent=1 // pred_check
      _
    $region15: #{tpu_custom_call.1} parent=1 // pred_check_branch
      %39 = sbr.rel (0) target = $region17
    $region16: #{tpu_custom_call.1} parent=1 // pred_region
      %40 = dma.done [#allocation6], 512
    $region17: #{tpu_custom_call.1} parent=1 // pred_fallthru
      _
    %v42 = vld [vmem:[#allocation2] sm:$0xf]
    %v43 = vld [vmem:[#allocation5] sm:$0xf]
    %v44 = vld [vmem:[#allocation5 + $0x4] sm:$0xf]
    %v45 = vld [vmem:[#allocation5 + $0x8] sm:$0xf]
    %v46 = vld [vmem:[#allocation5 + $0xc] sm:$0xf]
    %v47 = vld [vmem:[#allocation5 + $0x10] sm:$0xf]
    %v48 = vld [vmem:[#allocation5 + $0x14] sm:$0xf]
    %v49 = vld [vmem:[#allocation5 + $0x18] sm:$0xf]
    %v50 = vld [vmem:[#allocation5 + $0x1c] sm:$0xf]
    %v59 = vunpack.c.l.b16 %v43
    %v60 = vunpack.c.l.b16 %v44
    %v61 = vunpack.c.l.b16 %v45
    %v62 = vunpack.c.l.b16 %v46
    %v63 = vunpack.c.l.b16 %v47
    %v64 = vunpack.c.l.b16 %v48
    %v65 = vunpack.c.l.b16 %v49
    %v66 = vunpack.c.l.b16 %v50
    %v67 = vpack.c.b16 %v60, %v59
    %v68 = vpack.c.b16 %v62, %v61
    %v69 = vpack.c.b16 %v64, %v63
    %v70 = vpack.c.b16 %v66, %v65
    %vm75 = vcmask 523264
    %v77 = vsel %vm75, %v42, 0
    %79 = vmatprep.subr.bf16.mxu0 0
    %80 = vmatpush1.bf16.msra.mxu0 %v67
    %81 = vmatprep.subr.bf16.mxu0 0
    %82 = vmatpush1.bf16.msra.mxu0 %v68
    %83 = vmatprep.subr.bf16.mxu0 0
    %84 = vmatpush1.bf16.msra.mxu0 %v69
    %85 = vmatprep.subr.bf16.mxu0 0
    %86 = vmatpush1.bf16.msra.mxu0 %v70
    %87 = vmatprep.subr.bf16.mxu0 0
    %88 = vmatpush1.bf16.msra.mxu0 0
    %89 = vmatprep.subr.bf16.mxu0 0
    %90 = vmatpush1.bf16.msra.mxu0 0
    %91 = vmatprep.subr.bf16.mxu0 0
    %92 = vmatpush1.bf16.msra.mxu0 0
    %93 = vmatprep.subr.bf16.mxu0 0
    %94 = vmatpush1.bf16.msra.mxu0 0
    %95 = vmatprep.subr.bf16.mxu0 0
    %96 = vmatpush1.bf16.msra.mxu0 0
    %97 = vmatprep.subr.bf16.mxu0 0
    %98 = vmatpush1.bf16.msra.mxu0 0
    %99 = vmatprep.subr.bf16.mxu0 0
    %100 = vmatpush1.bf16.msra.mxu0 0
    %101 = vmatprep.subr.bf16.mxu0 0
    %102 = vmatpush1.bf16.msra.mxu0 0
    %103 = vmatprep.subr.bf16.mxu0 0
    %104 = vmatpush1.bf16.msra.mxu0 0
    %105 = vmatprep.subr.bf16.mxu0 0
    %106 = vmatpush1.bf16.msra.mxu0 0
    %107 = vmatprep.subr.bf16.mxu0 0
    %108 = vmatpush1.bf16.msra.mxu0 0
    %109 = vmatprep.subr.bf16.mxu0 0
    %110 = vmatpush1.bf16.msra.mxu0 0
    %111 = vmatprep.mubr.bf16.mxu0 0
    %112 = vmatmul.mubr.bf16.gmra.mrb[0].mxu0 %v77
    %v113 = vpop.f32.mrb[0].mxu0
    %v114 = vadd.f32 0.0, %v113
    %v115 = vpop.f32.mrb[0].mxu0
    %v116 = vpop.f32.mrb[0].mxu0
    %v117 = vpop.f32.mrb[0].mxu0
    %118 = vdwg.mxu0
    %119 = vst [vmem:[#allocation7] sm:$0xff] %v114
    %120 = vadd.xlane.f32.xlu0 %v114
    %v121 = vpop.xlane.xlu0 %120
    %vm122 = vcmask 7168
    %123 = vst.msk [vmem:[%s3] sm:$0xff] %vm122, %v121
    %v124 = vmul.f32 %v114, %v114
    %125 = vadd.xlane.f32.xlu0 %v124
    %v126 = vpop.xlane.xlu0 %125
    %127 = vst.msk [vmem:[%s4] sm:$0xff] %vm122, %v126
    // Predicated region
    $region18: #{tpu_custom_call.1} parent=1 // pred_check
      _
    $region19: #{tpu_custom_call.1} parent=1 // pred_check_branch
      %129 = sbr.rel (0) target = $region21
    $region20: #{tpu_custom_call.1} parent=1 // pred_region
      %s131 = ssub.s32 128, 128
      %132 = vsyncadd [#allocation4], %s131
      %s134 = sshll.u32 [#allocation7], 4
      %s135 = int_to_ptr.vmem [resolvable:$true] %s134
      %137 = dma.vmem_to_hbm [thread:$0]  %s135, 128, %s2, [#allocation4]
    $region21: #{tpu_custom_call.1} parent=1 // pred_fallthru
      _
    // Predicated region
    $region22: #{tpu_custom_call.1} parent=1 // pred_check
      _
    $region23: #{tpu_custom_call.1} parent=1 // pred_check_branch
      %139 = sbr.rel (0) target = $region25
    $region24: #{tpu_custom_call.1} parent=1 // pred_region
      _
    $region25: #{tpu_custom_call.1} parent=1 // pred_fallthru
      _
    // Predicated region
    $region26: #{tpu_custom_call.1} parent=1 // pred_check
      _
    $region27: #{tpu_custom_call.1} parent=1 // pred_check_branch
      %141 = sbr.rel (0) target = $region29
    $region28: #{tpu_custom_call.1} parent=1 // pred_region
      _
    $region29: #{tpu_custom_call.1} parent=1 // pred_fallthru
      _
    // Predicated region
    $region30: #{tpu_custom_call.1} parent=1 // pred_check
      _
    $region31: #{tpu_custom_call.1} parent=1 // pred_check_branch
      %143 = sbr.rel (0) target = $region33
    $region32: #{tpu_custom_call.1} parent=1 // pred_region
      %144 = dma.done [#allocation4], 128
    $region33: #{tpu_custom_call.1} parent=1 // pred_fallthru
      _
    // Predicated region
    $region34: #{tpu_custom_call.1} parent=1 // pred_check
      _
    $region35: #{tpu_custom_call.1} parent=1 // pred_check_branch
      %146 = sbr.rel (0) target = $region37
    $region36: #{tpu_custom_call.1} parent=1 // pred_region
      _
    $region37: #{tpu_custom_call.1} parent=1 // pred_fallthru
      _
    // Predicated region
    $region38: #{tpu_custom_call.1} parent=1 // pred_check
      _
    $region39: #{tpu_custom_call.1} parent=1 // pred_check_branch
      %148 = sbr.rel (0) target = $region41
    $region40: #{tpu_custom_call.1} parent=1 // pred_region
      _
    $region41: #{tpu_custom_call.1} parent=1 // pred_fallthru
      _
    %149 = vsyncpa [#allocation3], 1
    %150 = vsyncpa [#allocation6], 1
    %151 = vsyncpa [#allocation4], 1

</llo_original>
